<compile_context>
chip_gen: v5e
topology: v5e:2x2
jax: 0.10.0
libtpu: 0.0.40
codegen_flags: <defaults>
</compile_context>

<pallas_src>
import functools

import jax
import jax.numpy as jnp
from jax import lax
from jax.experimental import pallas as pl
from jax.experimental.pallas import tpu as pltpu

EPS = 1e-7          # module references a global EPS; defined deterministically here
_LANES = 128
_MAX_ROW_BLOCK = 1024   # (1024,128) f32 block = 512 KiB per input


def _kl_partial_kernel(t_ref, p_ref, o_ref, *, rows, row_block, need_mask):
    """Per-block partial sum of clamp(t) * (log(clamp(t)) - log(clamp(p))).

    Writes a (1, 1, 128) lane-vector partial; the cheap cross-lane reduction
    is done in the wrapper.
    """
    t = t_ref[...].astype(jnp.float32)
    p = p_ref[...].astype(jnp.float32)

    if need_mask:
        # Last grid block may hang off the end of the array; neutralize
        # out-of-range rows with 0.5 (clamp keeps 0.5, log(0.5)-log(0.5)=0).
        i = pl.program_id(0)
        row_ids = i * row_block + lax.broadcasted_iota(
            jnp.int32, (row_block, _LANES), 0
        )
        valid = row_ids < rows
        t = jnp.where(valid, t, 0.5)
        p = jnp.where(valid, p, 0.5)

    t = jnp.clip(t, EPS, 1.0 - EPS)
    p = jnp.clip(p, EPS, 1.0 - EPS)
    # log on the EUP; avoids the multi-instruction f32 divide on the VPU.
    prod = t * (jnp.log(t) - jnp.log(p))

    if row_block % 8 == 0:
        # Reduce the leading dim with plain vreg adds (VPU), then one cheap
        # sublane reduce (8,128) -> (1,128) per grid step.
        part8 = prod.reshape(row_block // 8, 8, _LANES).sum(axis=0)
        part = jnp.sum(part8, axis=0, keepdims=True)
    else:
        # Only reachable for small single-block inputs (rows < 8*k, not mult of 8).
        part = jnp.sum(prod, axis=0, keepdims=True)

    o_ref[...] = part.reshape(1, 1, _LANES)


def _kl_elementwise(t, p):
    t = jnp.clip(t.astype(jnp.float32), EPS, 1.0 - EPS)
    p = jnp.clip(p.astype(jnp.float32), EPS, 1.0 - EPS)
    return t * (jnp.log(t) - jnp.log(p))


@jax.jit
def kl_loss(true, pred):
    assert true.shape == pred.shape
    n = true.shape[0]            # N = true.size()[0] in the PyTorch module
    total = true.size

    t_flat = jnp.ravel(true)     # free reshape of a contiguous tensor
    p_flat = jnp.ravel(pred)

    rem = total % _LANES
    main = total - rem

    total_sum = jnp.float32(0.0)

    if main > 0:
        rows = main // _LANES
        if rem == 0:
            t2 = t_flat.reshape(rows, _LANES)           # no copy, no pad
            p2 = p_flat.reshape(rows, _LANES)
        else:
            # Only when total is not a multiple of 128: slice off the <128-elem
            # tail (handled with plain jnp below).
            t2 = t_flat[:main].reshape(rows, _LANES)
            p2 = p_flat[:main].reshape(rows, _LANES)

        row_block = _MAX_ROW_BLOCK if rows >= _MAX_ROW_BLOCK else rows
        num_blocks = pl.cdiv(rows, row_block)
        need_mask = (rows % row_block) != 0

        kernel = functools.partial(
            _kl_partial_kernel, rows=rows, row_block=row_block, need_mask=need_mask
        )

        partials = pl.pallas_call(
            kernel,
            out_shape=jax.ShapeDtypeStruct((num_blocks, 1, _LANES), jnp.float32),
            grid_spec=pltpu.PrefetchScalarGridSpec(
                num_scalar_prefetch=0,
                grid=(num_blocks,),
                in_specs=[
                    pl.BlockSpec((row_block, _LANES), lambda i: (i, 0)),
                    pl.BlockSpec((row_block, _LANES), lambda i: (i, 0)),
                ],
                out_specs=pl.BlockSpec((1, 1, _LANES), lambda i: (i, 0, 0)),
            ),
            compiler_params=pltpu.CompilerParams(
                # Each grid step writes its own partial block -> fully parallel
                # axis (lets v7x's two TensorCores split the reduction).
                dimension_semantics=("parallel",),
            ),
        )(t2, p2)
        total_sum = total_sum + jnp.sum(partials)

    if rem > 0:
        total_sum = total_sum + jnp.sum(
            _kl_elementwise(t_flat[main:], p_flat[main:])
        )

    return total_sum / jnp.float32(n)


def _kl_loss_ref(true, pred):
    t = jnp.clip(true.astype(jnp.float32), EPS, 1.0 - EPS)
    p = jnp.clip(pred.astype(jnp.float32), EPS, 1.0 - EPS)
    return jnp.sum(t * jnp.log(t / p)) / true.shape[0]


if __name__ == "__main__":
    key = jax.random.PRNGKey(0)
    k1, k2, k3, k4, k5, k6 = jax.random.split(key, 6)

    # 1) Module-sized NCHW input: single block, no masking, no tail.
    shape = (2, 4, 16, 16)
    true = jax.random.uniform(k1, shape, dtype=jnp.float32)
    pred = jax.random.uniform(k2, shape, dtype=jnp.float32)
    out = jax.block_until_ready(kl_loss(true, pred))
    ref = _kl_loss_ref(true, pred)
    assert jnp.allclose(out, ref, rtol=1e-5, atol=1e-5), (out, ref)

    # 2) Multi-block path with a partial (masked) last block: rows = 1040 > 1024.
    shape2 = (2, 4, 128, 130)
    t2 = jax.random.uniform(k3, shape2, dtype=jnp.float32)
    p2 = jax.random.uniform(k4, shape2, dtype=jnp.float32)
    out2 = jax.block_until_ready(kl_loss(t2, p2))
    ref2 = _kl_loss_ref(t2, p2)
    assert jnp.allclose(out2, ref2, rtol=1e-4, atol=1e-4), (out2, ref2)

    # 3) Odd sizes: rows not a multiple of 8 and a <128-element tail.
    shape3 = (3, 5, 7, 11)
    t3 = jax.random.uniform(k5, shape3, dtype=jnp.float32)
    p3 = jax.random.uniform(k6, shape3, dtype=jnp.float32)
    out3 = jax.block_until_ready(kl_loss(t3, p3))
    ref3 = _kl_loss_ref(t3, p3)
    assert jnp.allclose(out3, ref3, rtol=1e-5, atol=1e-5), (out3, ref3)

    print("KERNEL_OK")
</pallas_src>

<mosaic_0001>
module attributes {stable_mosaic.version = 11 : i64} {
  func.func @_kl_partial_kernel(%arg0: i32, %arg1: memref<16x128xf32, #tpu.memory_space<vmem>>, %arg2: memref<16x128xf32, #tpu.memory_space<vmem>>, %arg3: memref<1x1x128xf32, #tpu.memory_space<vmem>>) attributes {dimension_semantics = [#tpu.dimension_semantics<parallel>], iteration_bounds = array<i64: 1>, scalar_prefetch = 0 : i64, scratch_operands = 0 : i64, tpu.core_type = #tpu.core_type<tc>, window_params = [{transform_indices = @transform_0, window_bounds = array<i64: 16, 128>}, {transform_indices = @transform_1, window_bounds = array<i64: 16, 128>}, {transform_indices = @transform_2, window_bounds = array<i64: 1, 1, 128>}]} {
    %c0 = arith.constant 0 : index
    %c0_0 = arith.constant 0 : index
    %0 = vector.load %arg1[%c0, %c0_0] : memref<16x128xf32, #tpu.memory_space<vmem>>, vector<16x128xf32>
    %c0_1 = arith.constant 0 : index
    %c0_2 = arith.constant 0 : index
    %1 = vector.load %arg2[%c0_1, %c0_2] : memref<16x128xf32, #tpu.memory_space<vmem>>, vector<16x128xf32>
    %cst = arith.constant 1.000000e-07 : f32
    %cst_3 = arith.constant 0.99999988 : f32
    %2 = vector.broadcast %cst : f32 to vector<16x128xf32>
    %3 = arith.maximumf %2, %0 : vector<16x128xf32>
    %4 = vector.broadcast %cst_3 : f32 to vector<16x128xf32>
    %5 = arith.minimumf %4, %3 : vector<16x128xf32>
    %cst_4 = arith.constant 1.000000e-07 : f32
    %cst_5 = arith.constant 0.99999988 : f32
    %6 = vector.broadcast %cst_4 : f32 to vector<16x128xf32>
    %7 = arith.maximumf %6, %1 : vector<16x128xf32>
    %8 = vector.broadcast %cst_5 : f32 to vector<16x128xf32>
    %9 = arith.minimumf %8, %7 : vector<16x128xf32>
    %10 = math.log %5 : vector<16x128xf32>
    %11 = math.log %9 : vector<16x128xf32>
    %12 = arith.subf %10, %11 : vector<16x128xf32>
    %13 = arith.mulf %5, %12 : vector<16x128xf32>
    %14 = vector.shape_cast %13 : vector<16x128xf32> to vector<2x8x128xf32>
    %cst_6 = arith.constant dense<0.000000e+00> : vector<8x128xf32>
    %15 = vector.multi_reduction <add>, %14, %cst_6 [0] : vector<2x8x128xf32> to vector<8x128xf32>
    %cst_7 = arith.constant dense<0.000000e+00> : vector<128xf32>
    %16 = vector.multi_reduction <add>, %15, %cst_7 [0] : vector<8x128xf32> to vector<128xf32>
    %17 = vector.shape_cast %16 : vector<128xf32> to vector<1x128xf32>
    %18 = vector.shape_cast %17 : vector<1x128xf32> to vector<1x1x128xf32>
    %c0_8 = arith.constant 0 : index
    %c0_9 = arith.constant 0 : index
    %c0_10 = arith.constant 0 : index
    %19 = vector.load %arg3[%c0_8, %c0_9, %c0_10] : memref<1x1x128xf32, #tpu.memory_space<vmem>>, vector<1x1x128xf32>
    tpu.vector_store %arg3[%c0_8, %c0_9, %c0_10], %18 {strides = array<i32>} : memref<1x1x128xf32, #tpu.memory_space<vmem>>, vector<1x1x128xf32>,
    return
  }
  func.func @transform_0(%arg0: i32) -> (i32, i32) {
    %c0_i32 = arith.constant 0 : i32
    %c0_i32_0 = arith.constant 0 : i32
    return %arg0, %c0_i32 : i32, i32
  }
  func.func @transform_1(%arg0: i32) -> (i32, i32) {
    %c0_i32 = arith.constant 0 : i32
    %c0_i32_0 = arith.constant 0 : i32
    return %arg0, %c0_i32 : i32, i32
  }
  func.func @transform_2(%arg0: i32) -> (i32, i32, i32) {
    %c0_i32 = arith.constant 0 : i32
    %c0_i32_0 = arith.constant 0 : i32
    %c0_i32_1 = arith.constant 0 : i32
    return %arg0, %c0_i32, %c0_i32_0 : i32, i32, i32
  }
}

</mosaic_0001>

<llo_original>
// kernel: kl_loss.1
$region0: #{kl_loss.1}
  #allocation0 [shape = 'u32[]', space=smem, size = 0x4, offset = 0x4, fixed_abs, tag = 'smem constant byte address 0x4 - core index']
  #allocation1 [shape = 'u32[72,128]{1,0:T(1,128)}', space=vmem, size = 0x9000, scoped, tag = 'internal scratch']
  %s0 = inlined_call_operand.vmem [shape: f32[16,128], index: 0, kind: input, shape index: {}]
  %s1 = inlined_call_operand.vmem [shape: f32[16,128], index: 1, kind: input, shape index: {}]
  %s2 = inlined_call_operand.vmem [shape: f32[1,1,128], index: 2, kind: output, shape index: {}]
  %s3 = sld [smem:[#allocation0]]
  $region18: #{kl_loss.1} parent=0
    _
  %s5 = ssub.s32 1, %s3
  %s6 = scalar_select 0, %s5, %s3
  // Predicated region
  $region2: #{kl_loss.1} parent=0 // pred_check
    _
  $region3: #{kl_loss.1} parent=0 // pred_check_branch
    %8 = sbr.rel (0) target = $region5
  $region4: #{kl_loss.1} parent=0 // pred_region
    _
  $region5: #{kl_loss.1} parent=0 // pred_fallthru
    _
  // Predicated region
  $region6: #{kl_loss.1} parent=0 // pred_check
    _
  $region7: #{kl_loss.1} parent=0 // pred_check_branch
    %10 = sbr.rel (0) target = $region9
  $region8: #{kl_loss.1} parent=0 // pred_region
    _
  $region9: #{kl_loss.1} parent=0 // pred_fallthru
    _
  %v11 = vld [vmem:[%s0] sm:$0xff]
  %v12 = vld [vmem:[%s0 + $0x8] sm:$0xff]
  %v13 = vld [vmem:[%s1] sm:$0xff]
  %v14 = vld [vmem:[%s1 + $0x8] sm:$0xff]
  %v15 = vmax.f32 %v11, 1e-07
  %v16 = vmax.f32 %v12, 1e-07
  %v17 = vmin.f32 %v15, 0.9999999
  %v18 = vmin.f32 %v16, 0.9999999
  %v19 = vmax.f32 %v13, 1e-07
  %v20 = vmax.f32 %v14, 1e-07
  %v21 = vmin.f32 %v19, 0.9999999
  %v22 = vmin.f32 %v20, 0.9999999
  %v23 = vlog2.pop %v17
  %v24 = vmul.f32 %v23, 0.6931472
  %v25 = vlog2.pop %v18
  %v26 = vmul.f32 %v25, 0.6931472
  %v27 = vlog2.pop %v21
  %v28 = vmul.f32 %v27, 0.6931472
  %v29 = vlog2.pop %v22
  %v30 = vmul.f32 %v29, 0.6931472
  %v31 = vsub.f32 %v24, %v28
  %v32 = vsub.f32 %v26, %v30
  %v33 = vmul.f32 %v17, %v31
  %v34 = vmul.f32 %v18, %v32
  %v35 = vadd.f32 %v33, %v34
  %v36 = vrot.slane %v35, 4
  %v37 = vadd.f32 %v35, %v36
  %v38 = vrot.slane %v37, 2
  %v39 = vadd.f32 %v37, %v38
  %v40 = vrot.slane %v39, 1
  %v41 = vadd.f32 %v39, %v40
  %42 = vst [vmem:[%s2] sm:$0x1] %v41
  // Predicated region
  $region10: #{kl_loss.1} parent=0 // pred_check
    _
  $region11: #{kl_loss.1} parent=0 // pred_check_branch
    %44 = sbr.rel (0) target = $region13
  $region12: #{kl_loss.1} parent=0 // pred_region
    _
  $region13: #{kl_loss.1} parent=0 // pred_fallthru
    _
  // Predicated region
  $region14: #{kl_loss.1} parent=0 // pred_check
    _
  $region15: #{kl_loss.1} parent=0 // pred_check_branch
    %46 = sbr.rel (0) target = $region17
  $region16: #{kl_loss.1} parent=0 // pred_region
    _
  $region17: #{kl_loss.1} parent=0 // pred_fallthru
    _

</llo_original>
